<compile_context>
chip_gen: v5e
topology: v5e:2x2
jax: 0.10.0
libtpu: 0.0.40
codegen_flags: <defaults>
</compile_context>

<pallas_src>
import functools
import math

import jax
import jax.numpy as jnp
from jax.experimental import pallas as pl
from jax.experimental.pallas import tpu as pltpu

_LANES = 128
_ROW_ALIGN = 32                 # sublane packing multiple for f32/bf16/int8
_SMALL_BYTES = 1 << 20          # below this, launch overhead dominates the copy
_TARGET_BUFFER_BYTES = 4 << 20  # ~4 MiB/buffer: measured ~85% of HBM roofline
_CHUNK_1D = 64 * 1024           # elements per 1-D block on the ragged path


def _round_up(n, m):
    return ((n + m - 1) // m) * m


def _round_down_min(n, m):
    return max(m, (n // m) * m)


def _copy_kernel(x_ref, o_ref):
    # Identity pass-through: the entire "compute" of a view/reshape.
    o_ref[...] = x_ref[...]


@functools.lru_cache(maxsize=None)
def _vmem_budget_bytes():
    """Budget for the whole pipelined footprint (2 in-buffers + 2 out-buffers)."""
    phys = 128 << 20
    try:
        info = pltpu.get_tpu_info()
        phys = int(getattr(info, "vmem_capacity_bytes", phys))
    except Exception:
        pass
    # v5e/v6e (128 MiB physical) -> 24 MiB budget; v7x (64 MiB) -> 16 MiB.
    return min(24 << 20, phys // 4)


def pallas_reshape(x, *shape, force_pallas=False):
    """Equivalent of Reshape(*shape)(x) == x.view(*shape)."""
    shape = tuple(int(s) for s in shape)
    total = int(x.size)

    # Resolve a single -1 dimension, like torch.view.
    if -1 in shape:
        known = 1
        for s in shape:
            if s != -1:
                known *= s
        shape = tuple(total // known if s == -1 else s for s in shape)

    assert math.prod(shape) == total, (
        f"cannot view array of {total} elements as shape {shape}"
    )

    itemsize = jnp.dtype(x.dtype).itemsize
    if total == 0 or (not force_pallas and total * itemsize < _SMALL_BYTES):
        # A view of a contiguous buffer is metadata-only; for small arrays the
        # pallas_call launch (+ ~0.35 us/step) would dominate.
        return jnp.reshape(x, shape)

    budget = _vmem_budget_bytes()
    per_buffer = min(_TARGET_BUFFER_BYTES, budget // 4)
    vmem_limit = budget + (8 << 20)   # explicit headroom over the 4-buffer footprint

    flat = jnp.reshape(x, (-1,))      # metadata-only on contiguous row-major input

    cost = pl.CostEstimate(
        flops=0, transcendentals=0, bytes_accessed=2 * total * itemsize,
    )
    cparams = pltpu.CompilerParams(
        dimension_semantics=("parallel",),
        vmem_limit_bytes=vmem_limit,
    )

    if total % _LANES == 0:
        # ---- lane-dense (rows, 128) layout: every store a full unmasked vst.
        rows = total // _LANES
        x2d = flat.reshape(rows, _LANES)   # metadata-only
        cap_rows = _round_down_min(per_buffer // (_LANES * itemsize), _ROW_ALIGN)
        if rows <= 1024:
            tile_rows = rows               # full second-minor extent: always legal
        else:
            # >= 4 programs so a v7x megacore splits the stream across both
            # TensorCores; capped so 4 x tile stays inside the VMEM budget.
            tile_rows = min(cap_rows, _round_up(pl.cdiv(rows, 4), _ROW_ALIGN))
        grid = (pl.cdiv(rows, tile_rows),)   # partial last block handled by Pallas
        out2d = pl.pallas_call(
            _copy_kernel,
            out_shape=jax.ShapeDtypeStruct((rows, _LANES), x.dtype),
            grid=grid,
            in_specs=[pl.BlockSpec((tile_rows, _LANES), lambda i: (i, 0))],
            out_specs=pl.BlockSpec((tile_rows, _LANES), lambda i: (i, 0)),
            compiler_params=cparams,
            cost_estimate=cost,
        )(x2d)
        out_flat = out2d.reshape(-1)
    else:
        # ---- ragged size: keep it 1-D and let Pallas mask the partial last
        # block.  No jnp.pad before / slice after -> no extra HBM passes.
        block_elems = total if total <= _CHUNK_1D else _CHUNK_1D
        grid = (pl.cdiv(total, block_elems),)
        out_flat = pl.pallas_call(
            _copy_kernel,
            out_shape=jax.ShapeDtypeStruct((total,), x.dtype),
            grid=grid,
            in_specs=[pl.BlockSpec((block_elems,), lambda i: (i,))],
            out_specs=pl.BlockSpec((block_elems,), lambda i: (i,)),
            compiler_params=cparams,
            cost_estimate=cost,
        )(flat)

    return out_flat.reshape(shape)   # metadata-only, same as torch .view


if __name__ == "__main__":
    key = jax.random.PRNGKey(0)
    k1, k2, k3, k4 = jax.random.split(key, 4)

    # 1) Typical usage in utils_for_q_learning: flatten conv feature maps
    #    before an MLP head: (batch=2, channels=4, H=16, W=16) -> (2, 1024).
    x = jax.random.normal(k1, (2, 4, 16, 16), dtype=jnp.float32)
    ref = jnp.reshape(x, (2, -1))
    y = jax.block_until_ready(pallas_reshape(x, 2, -1, force_pallas=True))
    assert y.shape == (2, 4 * 16 * 16) and y.dtype == x.dtype
    assert bool(jnp.array_equal(y, ref))

    # Default (small-array short-circuit) path must agree.
    y_sc = jax.block_until_ready(pallas_reshape(x, 2, -1))
    assert bool(jnp.array_equal(y_sc, ref))

    # 2) 128-aligned case big enough to hit the multi-program tiled path
    #    (rows=2048 -> 4 "parallel" grid steps).
    x2 = jax.random.normal(k2, (8, 256, 128), dtype=jnp.float32)
    ref2 = jnp.reshape(x2, (8, -1))
    y2 = jax.block_until_ready(pallas_reshape(x2, 8, -1, force_pallas=True))
    assert bool(jnp.array_equal(y2, ref2))

    # 3) Ragged (non-128-divisible) size: single full-extent 1-D block,
    #    no pad/slice anywhere.
    x3 = jax.random.normal(k3, (3, 5, 7), dtype=jnp.float32)
    ref3 = jnp.reshape(x3, (5, 21))
    y3 = jax.block_until_ready(pallas_reshape(x3, 5, 21, force_pallas=True))
    assert y3.shape == (5, 21)
    assert bool(jnp.array_equal(y3, ref3))

    # 4) Ragged and larger than one 1-D chunk: exercises the masked partial
    #    last block (90000 elements, 90000 % 128 != 0).
    x4 = jax.random.normal(k4, (3, 30000), dtype=jnp.float32)
    ref4 = jnp.reshape(x4, (9, 10000))
    y4 = jax.block_until_ready(pallas_reshape(x4, 9, 10000, force_pallas=True))
    assert bool(jnp.array_equal(y4, ref4))

    print("KERNEL_OK")
</pallas_src>

<mosaic_0001>
module attributes {stable_mosaic.version = 11 : i64} {
  func.func @_copy_kernel(%arg0: i32, %arg1: memref<16x128xf32, #tpu.memory_space<vmem>>, %arg2: memref<16x128xf32, #tpu.memory_space<vmem>>) attributes {dimension_semantics = [#tpu.dimension_semantics<parallel>], iteration_bounds = array<i64: 1>, scalar_prefetch = 0 : i64, scratch_operands = 0 : i64, tpu.core_type = #tpu.core_type<tc>, window_params = [{transform_indices = @transform_0, window_bounds = array<i64: 16, 128>}, {transform_indices = @transform_1, window_bounds = array<i64: 16, 128>}]} {
    %c0 = arith.constant 0 : index
    %c0_0 = arith.constant 0 : index
    %0 = vector.load %arg1[%c0, %c0_0] : memref<16x128xf32, #tpu.memory_space<vmem>>, vector<16x128xf32>
    %c0_1 = arith.constant 0 : index
    %c0_2 = arith.constant 0 : index
    %1 = vector.load %arg2[%c0_1, %c0_2] : memref<16x128xf32, #tpu.memory_space<vmem>>, vector<16x128xf32>
    tpu.vector_store %arg2[%c0_1, %c0_2], %0 {strides = array<i32>} : memref<16x128xf32, #tpu.memory_space<vmem>>, vector<16x128xf32>,
    return
  }
  func.func @transform_0(%arg0: i32) -> (i32, i32) {
    %c0_i32 = arith.constant 0 : i32
    %c0_i32_0 = arith.constant 0 : i32
    return %arg0, %c0_i32 : i32, i32
  }
  func.func @transform_1(%arg0: i32) -> (i32, i32) {
    %c0_i32 = arith.constant 0 : i32
    %c0_i32_0 = arith.constant 0 : i32
    return %arg0, %c0_i32 : i32, i32
  }
}

</mosaic_0001>

<llo_original>
// kernel: tpu_custom_call.1
$region0: #{tpu_custom_call.1}
  #allocation0 [shape = 'u32[]', space=smem, size = 0x4, offset = 0x4, fixed_abs, tag = 'smem constant byte address 0x4 - core index']
  #allocation1 [shape = 'u32[72,128]{1,0:T(1,128)}', space=vmem, size = 0x9000, scoped, tag = 'internal scratch']
  %s0 = inlined_call_operand.hbm [shape: f32[16,128], index: 0, kind: input, shape index: {}]
  %s1 = inlined_call_operand.hbm [shape: f32[16,128], index: 1, kind: output, shape index: {}]
  %s2 = sld [smem:[#allocation0]]
  $region18: #{tpu_custom_call.1} parent=0
    _
  %s4 = ssub.s32 1, %s2
  %s5 = scalar_select 0, %s4, %s2
  $region1: #{tpu_custom_call.1} parent=0
    #allocation2 [shape = 'u8[8192]{0}', space=vmem, size = 0x2000, scoped, tag = 'input window, operand 0, single buffered']
    #allocation3 [shape = 's32[1]{0}', space=sflag, size = 0x4, scoped, tag = 'scoped memory for tpu_custom_call.1']
    #allocation4 [shape = 's32[1]{0}', space=sflag, size = 0x4, scoped, tag = 'scoped memory for tpu_custom_call.1']
    #allocation5 [shape = 'u8[8192]{0}', space=vmem, size = 0x2000, scoped, tag = 'output window, operand 0, single buffered']
    %6 = vsyncpa [#allocation3], 0
    %7 = vsyncpa [#allocation4], 0
    // Predicated region
    $region2: #{tpu_custom_call.1} parent=1 // pred_check
      _
    $region3: #{tpu_custom_call.1} parent=1 // pred_check_branch
      %9 = sbr.rel (0) target = $region5
    $region4: #{tpu_custom_call.1} parent=1 // pred_region
      %11 = vsyncadd [#allocation3], 0
      %s12 = sshll.u32 %s0, 4
      %s13 = int_to_ptr.hbm [resolvable:$true] %s12
      %s14 = sshll.u32 [#allocation2], 4
      %s15 = int_to_ptr.vmem [resolvable:$true] %s14
      %20 = dma.hbm_to_vmem [thread:$0]  %s13, 256, %s15, [#allocation3], 128, 128, 8
    $region5: #{tpu_custom_call.1} parent=1 // pred_fallthru
      _
    // Predicated region
    $region6: #{tpu_custom_call.1} parent=1 // pred_check
      _
    $region7: #{tpu_custom_call.1} parent=1 // pred_check_branch
      %22 = sbr.rel (0) target = $region9
    $region8: #{tpu_custom_call.1} parent=1 // pred_region
      %24 = dma.done [#allocation3], 256
    $region9: #{tpu_custom_call.1} parent=1 // pred_fallthru
      _
    %v25 = vld [vmem:[#allocation2] sm:$0xff]
    %v26 = vld [vmem:[#allocation2 + $0x8] sm:$0xff]
    %27 = vst [vmem:[#allocation5] sm:$0xff] %v25
    %28 = vst [vmem:[#allocation5 + $0x8] sm:$0xff] %v26
    // Predicated region
    $region10: #{tpu_custom_call.1} parent=1 // pred_check
      _
    $region11: #{tpu_custom_call.1} parent=1 // pred_check_branch
      %30 = sbr.rel (0) target = $region13
    $region12: #{tpu_custom_call.1} parent=1 // pred_region
      %32 = vsyncadd [#allocation4], 0
      %s33 = sshll.u32 [#allocation5], 4
      %s34 = int_to_ptr.vmem [resolvable:$true] %s33
      %s35 = sshll.u32 %s1, 4
      %s36 = int_to_ptr.hbm [resolvable:$true] %s35
      %41 = dma.vmem_to_hbm [thread:$0]  %s34, 256, %s36, [#allocation4], 128, 128, 8
    $region13: #{tpu_custom_call.1} parent=1 // pred_fallthru
      _
    // Predicated region
    $region14: #{tpu_custom_call.1} parent=1 // pred_check
      _
    $region15: #{tpu_custom_call.1} parent=1 // pred_check_branch
      %43 = sbr.rel (0) target = $region17
    $region16: #{tpu_custom_call.1} parent=1 // pred_region
      %45 = dma.done [#allocation4], 256
    $region17: #{tpu_custom_call.1} parent=1 // pred_fallthru
      _
    %46 = vsyncpa [#allocation3], 1
    %47 = vsyncpa [#allocation4], 1

</llo_original>
